<compile_context>
chip_gen: v7x
topology: tpu7x:2x2x1
jax: 0.10.0
libtpu: 0.0.40
codegen_flags: <defaults>
</compile_context>

<pallas_src>
import functools
import math

import jax
import jax.numpy as jnp
from jax.experimental import pallas as pl
from jax.experimental.pallas import tpu as pltpu


def _round_up(v, m):
    return ((v + m - 1) // m) * m


# ----------------------------- fused Pallas kernel ---------------------------

def _bias_act(x, b_ref, relu):
    """f32 bias-add (+ optional ReLU). Bias is pre-broadcast to an 8-row sublane
    tile at pack time; falls back to a broadcast add if the batch differs."""
    b = b_ref[...]
    b = b if b.shape[0] == x.shape[0] else b[:1, :]
    y = x + b
    return jnp.maximum(y, 0.0) if relu else y


def _fused_mlp_kernel(*refs, n_hidden: int):
    """refs = (obs, a, w0_obs, w0_act, b0, [w_i, b_i]*(n_hidden-1), w_f, b_f, out).

    All refs are VMEM-resident.  Activations stay in vregs/VMEM; every matmul
    accumulates in f32 on the MXU (bf16 operands).
    """
    obs_ref, a_ref = refs[0], refs[1]
    out_ref = refs[-1]
    w0o_ref, w0a_ref, b0_ref = refs[2], refs[3], refs[4]
    wdt = w0o_ref.dtype  # bf16 weights

    # First layer: split matmul replaces the host-side concat(obs, a).
    # TODO(synk): merge into a single dot (weights concatenated along K at pack
    # time + in-kernel lane concat via pltpu.roll/select) once the unaligned
    # lane-concat lowering is verified; saves one MXU weight-push on the
    # latency-critical path.
    x = (jnp.dot(obs_ref[...].astype(wdt), w0o_ref[...],
                 preferred_element_type=jnp.float32)
         + jnp.dot(a_ref[...].astype(wdt), w0a_ref[...],
                   preferred_element_type=jnp.float32))
    x = _bias_act(x, b0_ref, relu=True)  # bias/ReLU in f32 (v5e-safe)

    idx = 5
    for _ in range(n_hidden - 1):
        w_ref, b_ref = refs[idx], refs[idx + 1]
        idx += 2
        x = jnp.dot(x.astype(wdt), w_ref[...], preferred_element_type=jnp.float32)
        x = _bias_act(x, b_ref, relu=True)

    wf_ref, bf_ref = refs[idx], refs[idx + 1]
    y = jnp.dot(x.astype(wdt), wf_ref[...], preferred_element_type=jnp.float32)
    y = _bias_act(y, bf_ref, relu=False)
    out_ref[...] = y.astype(out_ref.dtype)


# ----------------------------- parameter handling ----------------------------

def init_raw_params(key, obs_size, act_size, hiddens=2, hidden_size=512):
    """nn.Linear-style init: U(-1/sqrt(fan_in), 1/sqrt(fan_in)).

    Returns list of (W[in, out], b[out]) in logical (unpadded) f32 layout.
    """
    assert hiddens > 0, "Must have at least 1 hidden layer"
    dims = [obs_size + act_size] + [hidden_size] * hiddens + [obs_size]
    params = []
    for i in range(len(dims) - 1):
        fan_in, fan_out = dims[i], dims[i + 1]
        key, kw, kb = jax.random.split(key, 3)
        bound = 1.0 / math.sqrt(fan_in)
        W = jax.random.uniform(kw, (fan_in, fan_out), jnp.float32, -bound, bound)
        b = jax.random.uniform(kb, (fan_out,), jnp.float32, -bound, bound)
        params.append((W, b))
    return params


def pack_params(raw_params, obs_size, act_size, *,
                weight_dtype=jnp.bfloat16, bias_rows=8):
    """Pad + cast ONCE into the kernel layout (never per forward).

    Returns a flat tuple:
      (w0_obs[obs, Hp], w0_act[act, Hp], b0[bias_rows, Hp],
       [W_i[Hp, Hp], b_i[bias_rows, Hp]] * (hiddens-1),
       W_f[Hp, Op], b_f[bias_rows, Op])
    with Hp = round_up(hidden, 128), Op = round_up(obs_size, 128).
    Weights are bf16 (MXU native); biases stay f32 and are pre-broadcast to a
    sublane tile so the bias add is a plain vadd.
    Zero padding + ReLU(0)=0 keeps all padded activation lanes exactly 0.
    """
    hidden_size = raw_params[0][0].shape[1]
    Hp = _round_up(hidden_size, 128)
    Op = _round_up(obs_size, 128)

    def pad_w(W, rows, cols, r, c):
        out = jnp.zeros((rows, cols), jnp.float32).at[:r, :c].set(W)
        return out.astype(weight_dtype)

    def pad_b(b, cols, c):
        row = jnp.zeros((1, cols), jnp.float32).at[0, :c].set(b)
        return jnp.broadcast_to(row, (bias_rows, cols)).astype(jnp.float32)

    W0, b0 = raw_params[0]
    packed = [
        pad_w(W0[:obs_size, :], obs_size, Hp, obs_size, hidden_size),
        pad_w(W0[obs_size:, :], act_size, Hp, act_size, hidden_size),
        pad_b(b0, Hp, hidden_size),
    ]
    for (W, b) in raw_params[1:-1]:
        packed.append(pad_w(W, Hp, Hp, hidden_size, hidden_size))
        packed.append(pad_b(b, Hp, hidden_size))
    Wf, bf = raw_params[-1]
    packed.append(pad_w(Wf, Hp, Op, hidden_size, obs_size))
    packed.append(pad_b(bf, Op, obs_size))
    return tuple(packed)


# ----------------------------- forward ----------------------------------------

@functools.partial(jax.jit, static_argnames=("obs_size", "hiddens", "slice_output"))
def dynamics_model_forward(packed, obs, a, *, obs_size, hiddens, slice_output=True):
    """DynamicsModel.forward: one fused Pallas kernel (no grid; latency-bound).

    obs: [B, obs_size], a: [B, act_size]; returns delta [B, obs_size] (f32), or the
    lane-dense padded [B, Op] slab if slice_output=False (slice at the consumer).
    """
    B = obs.shape[0]
    Op = packed[-1].shape[-1]  # padded output width (lane-dense, multiple of 128)
    kernel = functools.partial(_fused_mlp_kernel, n_hidden=hiddens)
    n_inputs = 2 + len(packed)

    out = pl.pallas_call(
        kernel,
        out_shape=jax.ShapeDtypeStruct((B, Op), jnp.float32),
        in_specs=[pl.BlockSpec(memory_space=pltpu.MemorySpace.VMEM)] * n_inputs,
        out_specs=pl.BlockSpec(memory_space=pltpu.MemorySpace.VMEM),
    )(obs, a, *packed)

    return out[:, :obs_size] if slice_output else out


@functools.partial(jax.jit, static_argnames=("obs_size", "hiddens", "slice_output"))
def dynamics_model_forward_many(packed, obs, a, *, obs_size, hiddens,
                                slice_output=True):
    """Amortized variant: evaluate N independent (obs, a) slices in ONE pallas_call.

    obs: [N, B, obs_size], a: [N, B, act_size] -> delta [N, B, obs_size].
    Weights use constant block indices across the grid, so they are DMA'd to VMEM
    once and stay resident for all N steps (removes N-1 launches + N-1 weight DMAs
    vs calling dynamics_model_forward in a loop).  The N axis is "parallel" so v7x
    megacore can split it.
    """
    N, B, od = obs.shape
    ad = a.shape[-1]
    Op = packed[-1].shape[-1]
    kernel = functools.partial(_fused_mlp_kernel, n_hidden=hiddens)

    def per_step(width):
        # Leading None => squeezed: kernel body sees the same 2-D refs as the
        # single-call path.
        return pl.BlockSpec((None, B, width), lambda s: (s, 0, 0))

    weight_specs = [
        pl.BlockSpec(p.shape, (lambda s, _nd=p.ndim: (0,) * _nd)) for p in packed
    ]

    out = pl.pallas_call(
        kernel,
        out_shape=jax.ShapeDtypeStruct((N, B, Op), jnp.float32),
        grid=(N,),
        in_specs=[per_step(od), per_step(ad)] + weight_specs,
        out_specs=pl.BlockSpec((None, B, Op), lambda s: (s, 0, 0)),
        compiler_params=pltpu.CompilerParams(dimension_semantics=("parallel",)),
    )(obs, a, *packed)

    return out[..., :obs_size] if slice_output else out


# ----------------------------- reference (pure JAX, f32) -----------------------

def _reference_forward(raw_params, obs, a):
    x = jnp.concatenate([obs, a], axis=-1).astype(jnp.float32)
    for (W, b) in raw_params[:-1]:
        x = jnp.maximum(x @ W + b, 0.0)
    W, b = raw_params[-1]
    return x @ W + b


if __name__ == "__main__":
    # Small shapes consistent with the module: batch=8, obs_size=24, act_size=9,
    # hiddens=2, hidden_size=64.  N=4 "ensemble" slices for the fused-grid variant.
    batch, obs_size, act_size = 8, 24, 9
    hiddens, hidden_size = 2, 64
    n_many = 4

    key = jax.random.PRNGKey(0)
    kp, ko, ka, ko2, ka2 = jax.random.split(key, 5)

    raw_params = init_raw_params(kp, obs_size, act_size, hiddens, hidden_size)
    packed = pack_params(raw_params, obs_size, act_size)  # padded/cast ONCE, at init

    obs = jax.random.normal(ko, (batch, obs_size), jnp.float32)
    act = jax.random.normal(ka, (batch, act_size), jnp.float32)

    # --- single-call fused kernel (module-equivalent forward) ---
    delta = dynamics_model_forward(packed, obs, act,
                                   obs_size=obs_size, hiddens=hiddens)
    delta = jax.block_until_ready(delta)
    ref = _reference_forward(raw_params, obs, act)
    assert delta.shape == (batch, obs_size)
    # bf16 weights/operands with f32 accumulation: compare at bf16-level tolerance.
    assert jnp.allclose(delta, ref, atol=2e-2, rtol=2e-2), "Mismatch vs reference"

    # --- amortized grid variant: N slices, one launch, weights resident ---
    obs_many = jax.random.normal(ko2, (n_many, batch, obs_size), jnp.float32)
    act_many = jax.random.normal(ka2, (n_many, batch, act_size), jnp.float32)
    delta_many = dynamics_model_forward_many(packed, obs_many, act_many,
                                             obs_size=obs_size, hiddens=hiddens)
    delta_many = jax.block_until_ready(delta_many)
    ref_many = jax.vmap(lambda o, a: _reference_forward(raw_params, o, a))(
        obs_many, act_many)
    assert delta_many.shape == (n_many, batch, obs_size)
    assert jnp.allclose(delta_many, ref_many, atol=2e-2, rtol=2e-2), \
        "Mismatch vs reference (many)"

    print("KERNEL_OK")
</pallas_src>

<mosaic_0001>
module attributes {stable_mosaic.version = 11 : i64} {
  func.func @_fused_mlp_kernel(%arg0: memref<8x24xf32, #tpu.memory_space<vmem>>, %arg1: memref<8x9xf32, #tpu.memory_space<vmem>>, %arg2: memref<24x128xbf16, #tpu.memory_space<vmem>>, %arg3: memref<9x128xbf16, #tpu.memory_space<vmem>>, %arg4: memref<8x128xf32, #tpu.memory_space<vmem>>, %arg5: memref<128x128xbf16, #tpu.memory_space<vmem>>, %arg6: memref<8x128xf32, #tpu.memory_space<vmem>>, %arg7: memref<128x128xbf16, #tpu.memory_space<vmem>>, %arg8: memref<8x128xf32, #tpu.memory_space<vmem>>, %arg9: memref<8x128xf32, #tpu.memory_space<vmem>>) attributes {dimension_semantics = [], scalar_prefetch = 0 : i64, scratch_operands = 0 : i64, tpu.core_type = #tpu.core_type<tc>} {
    %c0 = arith.constant 0 : index
    %c0_0 = arith.constant 0 : index
    %0 = vector.load %arg0[%c0, %c0_0] : memref<8x24xf32, #tpu.memory_space<vmem>>, vector<8x24xf32>
    %1 = arith.truncf %0 : vector<8x24xf32> to vector<8x24xbf16>
    %c0_1 = arith.constant 0 : index
    %c0_2 = arith.constant 0 : index
    %2 = vector.load %arg2[%c0_1, %c0_2] : memref<24x128xbf16, #tpu.memory_space<vmem>>, vector<24x128xbf16>
    %cst = arith.constant dense<0.000000e+00> : vector<8x128xf32>
    %3 = tpu.matmul %1, %2, %cst {dimension_numbers = #tpu.dot_dimension_numbers<[1], [0], [0], [1], [0, 0, 1, 1], [], []>} : vector<8x24xbf16>, vector<24x128xbf16>, vector<8x128xf32> -> vector<8x128xf32>
    %c0_3 = arith.constant 0 : index
    %c0_4 = arith.constant 0 : index
    %4 = vector.load %arg1[%c0_3, %c0_4] : memref<8x9xf32, #tpu.memory_space<vmem>>, vector<8x9xf32>
    %5 = arith.truncf %4 : vector<8x9xf32> to vector<8x9xbf16>
    %c0_5 = arith.constant 0 : index
    %c0_6 = arith.constant 0 : index
    %6 = vector.load %arg3[%c0_5, %c0_6] : memref<9x128xbf16, #tpu.memory_space<vmem>>, vector<9x128xbf16>
    %cst_7 = arith.constant dense<0.000000e+00> : vector<8x128xf32>
    %7 = tpu.matmul %5, %6, %cst_7 {dimension_numbers = #tpu.dot_dimension_numbers<[1], [0], [0], [1], [0, 0, 1, 1], [], []>} : vector<8x9xbf16>, vector<9x128xbf16>, vector<8x128xf32> -> vector<8x128xf32>
    %8 = arith.addf %3, %7 : vector<8x128xf32>
    %c0_8 = arith.constant 0 : index
    %c0_9 = arith.constant 0 : index
    %9 = vector.load %arg4[%c0_8, %c0_9] : memref<8x128xf32, #tpu.memory_space<vmem>>, vector<8x128xf32>
    %10 = arith.addf %8, %9 : vector<8x128xf32>
    %cst_10 = arith.constant 0.000000e+00 : f32
    %11 = vector.broadcast %cst_10 : f32 to vector<8x128xf32>
    %12 = arith.maximumf %10, %11 : vector<8x128xf32>
    %13 = arith.truncf %12 : vector<8x128xf32> to vector<8x128xbf16>
    %c0_11 = arith.constant 0 : index
    %c0_12 = arith.constant 0 : index
    %14 = vector.load %arg5[%c0_11, %c0_12] : memref<128x128xbf16, #tpu.memory_space<vmem>>, vector<128x128xbf16>
    %cst_13 = arith.constant dense<0.000000e+00> : vector<8x128xf32>
    %15 = tpu.matmul %13, %14, %cst_13 {dimension_numbers = #tpu.dot_dimension_numbers<[1], [0], [0], [1], [0, 0, 1, 1], [], []>} : vector<8x128xbf16>, vector<128x128xbf16>, vector<8x128xf32> -> vector<8x128xf32>
    %c0_14 = arith.constant 0 : index
    %c0_15 = arith.constant 0 : index
    %16 = vector.load %arg6[%c0_14, %c0_15] : memref<8x128xf32, #tpu.memory_space<vmem>>, vector<8x128xf32>
    %17 = arith.addf %15, %16 : vector<8x128xf32>
    %cst_16 = arith.constant 0.000000e+00 : f32
    %18 = vector.broadcast %cst_16 : f32 to vector<8x128xf32>
    %19 = arith.maximumf %17, %18 : vector<8x128xf32>
    %20 = arith.truncf %19 : vector<8x128xf32> to vector<8x128xbf16>
    %c0_17 = arith.constant 0 : index
    %c0_18 = arith.constant 0 : index
    %21 = vector.load %arg7[%c0_17, %c0_18] : memref<128x128xbf16, #tpu.memory_space<vmem>>, vector<128x128xbf16>
    %cst_19 = arith.constant dense<0.000000e+00> : vector<8x128xf32>
    %22 = tpu.matmul %20, %21, %cst_19 {dimension_numbers = #tpu.dot_dimension_numbers<[1], [0], [0], [1], [0, 0, 1, 1], [], []>} : vector<8x128xbf16>, vector<128x128xbf16>, vector<8x128xf32> -> vector<8x128xf32>
    %c0_20 = arith.constant 0 : index
    %c0_21 = arith.constant 0 : index
    %23 = vector.load %arg8[%c0_20, %c0_21] : memref<8x128xf32, #tpu.memory_space<vmem>>, vector<8x128xf32>
    %24 = arith.addf %22, %23 : vector<8x128xf32>
    %c0_22 = arith.constant 0 : index
    %c0_23 = arith.constant 0 : index
    %25 = vector.load %arg9[%c0_22, %c0_23] : memref<8x128xf32, #tpu.memory_space<vmem>>, vector<8x128xf32>
    tpu.vector_store %arg9[%c0_22, %c0_23], %24 {strides = array<i32>} : memref<8x128xf32, #tpu.memory_space<vmem>>, vector<8x128xf32>,
    return
  }
}

</mosaic_0001>

<llo_original>
// kernel: dynamics_model_forward.1
$region0: #{dynamics_model_forward.1}
  #allocation0 [shape = 'u32[]', space=smem, size = 0x4, offset = 0x4, fixed_abs, tag = 'smem constant byte address 0x4 - core index']
  #allocation1 [shape = 'u32[144,128]{1,0:T(1,128)}', space=vmem, size = 0x12000, scoped, tag = 'internal scratch']
  %s0 = inlined_call_operand.vmem [shape: f32[8,24], index: 0, kind: input, shape index: {}]
  %s1 = inlined_call_operand.vmem [shape: f32[8,9], index: 1, kind: input, shape index: {}]
  %s2 = inlined_call_operand.hbm [shape: bf16[24,128], index: 2, kind: input, shape index: {}]
  %s3 = inlined_call_operand.hbm [shape: bf16[9,128], index: 3, kind: input, shape index: {}]
  %s4 = inlined_call_operand.hbm [shape: f32[8,128], index: 4, kind: input, shape index: {}]
  %s5 = inlined_call_operand.hbm [shape: bf16[128,128], index: 5, kind: input, shape index: {}]
  %s6 = inlined_call_operand.hbm [shape: f32[8,128], index: 6, kind: input, shape index: {}]
  %s7 = inlined_call_operand.hbm [shape: bf16[128,128], index: 7, kind: input, shape index: {}]
  %s8 = inlined_call_operand.hbm [shape: f32[8,128], index: 8, kind: input, shape index: {}]
  %s9 = inlined_call_operand.hbm [shape: f32[8,128], index: 9, kind: output, shape index: {}]
  %s10 = sld [smem:[#allocation0]]
  $region74: #{dynamics_model_forward.1} parent=0
    _
  %s12 = ssub.s32 1, %s10
  %s13 = scalar_select 0, %s12, %s10
  $region1: #{dynamics_model_forward.1} parent=0
    #allocation2 [shape = 'u8[6144]{0}', space=vmem, size = 0x1800, scoped, tag = 'input window, operand 2, single buffered']
    #allocation3 [shape = 's32[1]{0}', space=sflag, size = 0x4, scoped, tag = 'scoped memory for dynamics_model_forward.1']
    #allocation4 [shape = 's32[1]{0}', space=sflag, size = 0x4, scoped, tag = 'scoped memory for dynamics_model_forward.1']
    #allocation5 [shape = 'u8[4096]{0}', space=vmem, size = 0x1000, scoped, tag = 'input window, operand 3, single buffered']
    #allocation6 [shape = 's32[1]{0}', space=sflag, size = 0x4, scoped, tag = 'scoped memory for dynamics_model_forward.1']
    #allocation7 [shape = 'u8[4096]{0}', space=vmem, size = 0x1000, scoped, tag = 'input window, operand 4, single buffered']
    #allocation8 [shape = 'u8[32768]{0}', space=vmem, size = 0x8000, scoped, tag = 'input window, operand 5, single buffered']
    #allocation9 [shape = 's32[1]{0}', space=sflag, size = 0x4, scoped, tag = 'scoped memory for dynamics_model_forward.1']
    #allocation10 [shape = 'u8[4096]{0}', space=vmem, size = 0x1000, scoped, tag = 'input window, operand 6, single buffered']
    #allocation11 [shape = 'u8[32768]{0}', space=vmem, size = 0x8000, scoped, tag = 'input window, operand 7, single buffered']
    #allocation12 [shape = 's32[1]{0}', space=sflag, size = 0x4, scoped, tag = 'scoped memory for dynamics_model_forward.1']
    #allocation13 [shape = 'u8[4096]{0}', space=vmem, size = 0x1000, scoped, tag = 'input window, operand 8, single buffered']
    #allocation14 [shape = 'u8[4096]{0}', space=vmem, size = 0x1000, scoped, tag = 'output window, operand 0, single buffered']
    %14 = vsyncpa [#allocation3], 0
    %15 = vsyncpa [#allocation6], 0
    %16 = vsyncpa [#allocation9], 0
    %17 = vsyncpa [#allocation12], 0
    %18 = vsyncpa [#allocation4], 0
    // Predicated region
    $region2: #{dynamics_model_forward.1} parent=1 // pred_check
      _
    $region3: #{dynamics_model_forward.1} parent=1 // pred_check_branch
      %20 = sbr.rel (0) target = $region5
    $region4: #{dynamics_model_forward.1} parent=1 // pred_region
      _
    $region5: #{dynamics_model_forward.1} parent=1 // pred_fallthru
      _
    // Predicated region
    $region6: #{dynamics_model_forward.1} parent=1 // pred_check
      _
    $region7: #{dynamics_model_forward.1} parent=1 // pred_check_branch
      %22 = sbr.rel (0) target = $region9
    $region8: #{dynamics_model_forward.1} parent=1 // pred_region
      _
    $region9: #{dynamics_model_forward.1} parent=1 // pred_fallthru
      _
    // Predicated region
    $region10: #{dynamics_model_forward.1} parent=1 // pred_check
      _
    $region11: #{dynamics_model_forward.1} parent=1 // pred_check_branch
      %24 = sbr.rel (0) target = $region13
    $region12: #{dynamics_model_forward.1} parent=1 // pred_region
      %s26 = ssub.s32 192, 192
      %27 = vsyncadd [#allocation3], %s26
      %s28 = sshll.u32 [#allocation2], 4
      %s29 = int_to_ptr.vmem [resolvable:$true] %s28
      %34 = dma.hbm_to_vmem [thread:$0]  %s2, 192, %s29, [#allocation3], 64, 64, 4
    $region13: #{dynamics_model_forward.1} parent=1 // pred_fallthru
      _
    // Predicated region
    $region14: #{dynamics_model_forward.1} parent=1 // pred_check
      _
    $region15: #{dynamics_model_forward.1} parent=1 // pred_check_branch
      %36 = sbr.rel (0) target = $region17
    $region16: #{dynamics_model_forward.1} parent=1 // pred_region
      %s38 = ssub.s32 128, 128
      %39 = vsyncadd [#allocation6], %s38
      %s40 = sshll.u32 [#allocation5], 4
      %s41 = int_to_ptr.vmem [resolvable:$true] %s40
      %46 = dma.hbm_to_vmem [thread:$0]  %s3, 128, %s41, [#allocation6], 64, 64, 4
    $region17: #{dynamics_model_forward.1} parent=1 // pred_fallthru
      _
    // Predicated region
    $region18: #{dynamics_model_forward.1} parent=1 // pred_check
      _
    $region19: #{dynamics_model_forward.1} parent=1 // pred_check_branch
      %48 = sbr.rel (0) target = $region21
    $region20: #{dynamics_model_forward.1} parent=1 // pred_region
      %s50 = ssub.s32 128, 128
      %51 = vsyncadd [#allocation6], %s50
      %s53 = sshll.u32 [#allocation7], 4
      %s54 = int_to_ptr.vmem [resolvable:$true] %s53
      %56 = dma.hbm_to_vmem [thread:$0]  %s4, 128, %s54, [#allocation6]
    $region21: #{dynamics_model_forward.1} parent=1 // pred_fallthru
      _
    // Predicated region
    $region22: #{dynamics_model_forward.1} parent=1 // pred_check
      _
    $region23: #{dynamics_model_forward.1} parent=1 // pred_check_branch
      %58 = sbr.rel (0) target = $region25
    $region24: #{dynamics_model_forward.1} parent=1 // pred_region
      %s60 = ssub.s32 1024, 1024
      %61 = vsyncadd [#allocation9], %s60
      %s62 = sshll.u32 [#allocation8], 4
      %s63 = int_to_ptr.vmem [resolvable:$true] %s62
      %68 = dma.hbm_to_vmem [thread:$0]  %s5, 1024, %s63, [#allocation9], 64, 64, 4
    $region25: #{dynamics_model_forward.1} parent=1 // pred_fallthru
      _
    // Predicated region
    $region26: #{dynamics_model_forward.1} parent=1 // pred_check
      _
    $region27: #{dynamics_model_forward.1} parent=1 // pred_check_branch
      %70 = sbr.rel (0) target = $region29
    $region28: #{dynamics_model_forward.1} parent=1 // pred_region
      %s72 = ssub.s32 128, 128
      %73 = vsyncadd [#allocation9], %s72
      %s75 = sshll.u32 [#allocation10], 4
      %s76 = int_to_ptr.vmem [resolvable:$true] %s75
      %78 = dma.hbm_to_vmem [thread:$0]  %s6, 128, %s76, [#allocation9]
    $region29: #{dynamics_model_forward.1} parent=1 // pred_fallthru
      _
    // Predicated region
    $region30: #{dynamics_model_forward.1} parent=1 // pred_check
      _
    $region31: #{dynamics_model_forward.1} parent=1 // pred_check_branch
      %80 = sbr.rel (0) target = $region33
    $region32: #{dynamics_model_forward.1} parent=1 // pred_region
      %s82 = ssub.s32 1024, 1024
      %83 = vsyncadd [#allocation12], %s82
      %s84 = sshll.u32 [#allocation11], 4
      %s85 = int_to_ptr.vmem [resolvable:$true] %s84
      %90 = dma.hbm_to_vmem [thread:$0]  %s7, 1024, %s85, [#allocation12], 64, 64, 4
    $region33: #{dynamics_model_forward.1} parent=1 // pred_fallthru
      _
    // Predicated region
    $region34: #{dynamics_model_forward.1} parent=1 // pred_check
      _
    $region35: #{dynamics_model_forward.1} parent=1 // pred_check_branch
      %92 = sbr.rel (0) target = $region37
    $region36: #{dynamics_model_forward.1} parent=1 // pred_region
      %s94 = ssub.s32 128, 128
      %95 = vsyncadd [#allocation12], %s94
      %s97 = sshll.u32 [#allocation13], 4
      %s98 = int_to_ptr.vmem [resolvable:$true] %s97
      %100 = dma.hbm_to_vmem [thread:$0]  %s8, 128, %s98, [#allocation12]
    $region37: #{dynamics_model_forward.1} parent=1 // pred_fallthru
      _
    // Predicated region
    $region38: #{dynamics_model_forward.1} parent=1 // pred_check
      _
    $region39: #{dynamics_model_forward.1} parent=1 // pred_check_branch
      %102 = sbr.rel (0) target = $region41
    $region40: #{dynamics_model_forward.1} parent=1 // pred_region
      %103 = dma.done [#allocation3], 192
    $region41: #{dynamics_model_forward.1} parent=1 // pred_fallthru
      _
    // Predicated region
    $region42: #{dynamics_model_forward.1} parent=1 // pred_check
      _
    $region43: #{dynamics_model_forward.1} parent=1 // pred_check_branch
      %105 = sbr.rel (0) target = $region45
    $region44: #{dynamics_model_forward.1} parent=1 // pred_region
      %106 = dma.done [#allocation6], 128
    $region45: #{dynamics_model_forward.1} parent=1 // pred_fallthru
      _
    // Predicated region
    $region46: #{dynamics_model_forward.1} parent=1 // pred_check
      _
    $region47: #{dynamics_model_forward.1} parent=1 // pred_check_branch
      %108 = sbr.rel (0) target = $region49
    $region48: #{dynamics_model_forward.1} parent=1 // pred_region
      %109 = dma.done [#allocation6], 128
    $region49: #{dynamics_model_forward.1} parent=1 // pred_fallthru
      _
    // Predicated region
    $region50: #{dynamics_model_forward.1} parent=1 // pred_check
      _
    $region51: #{dynamics_model_forward.1} parent=1 // pred_check_branch
      %111 = sbr.rel (0) target = $region53
    $region52: #{dynamics_model_forward.1} parent=1 // pred_region
      %112 = dma.done [#allocation9], 1024
    $region53: #{dynamics_model_forward.1} parent=1 // pred_fallthru
      _
    // Predicated region
    $region54: #{dynamics_model_forward.1} parent=1 // pred_check
      _
    $region55: #{dynamics_model_forward.1} parent=1 // pred_check_branch
      %114 = sbr.rel (0) target = $region57
    $region56: #{dynamics_model_forward.1} parent=1 // pred_region
      %115 = dma.done [#allocation9], 128
    $region57: #{dynamics_model_forward.1} parent=1 // pred_fallthru
      _
    // Predicated region
    $region58: #{dynamics_model_forward.1} parent=1 // pred_check
      _
    $region59: #{dynamics_model_forward.1} parent=1 // pred_check_branch
      %117 = sbr.rel (0) target = $region61
    $region60: #{dynamics_model_forward.1} parent=1 // pred_region
      %118 = dma.done [#allocation12], 1024
    $region61: #{dynamics_model_forward.1} parent=1 // pred_fallthru
      _
    // Predicated region
    $region62: #{dynamics_model_forward.1} parent=1 // pred_check
      _
    $region63: #{dynamics_model_forward.1} parent=1 // pred_check_branch
      %120 = sbr.rel (0) target = $region65
    $region64: #{dynamics_model_forward.1} parent=1 // pred_region
      %121 = dma.done [#allocation12], 128
    $region65: #{dynamics_model_forward.1} parent=1 // pred_fallthru
      _
    %v123 = vld [vmem:[%s0] sm:$0xff]
    %v124 = vpack.c.bf16 %v123, %v123
    %v125 = vld [vmem:[#allocation2] sm:$0xf]
    %v126 = vld [vmem:[#allocation2 + $0x4] sm:$0xf]
    %v127 = vld [vmem:[#allocation2 + $0x8] sm:$0xf]
    %v128 = vld [vmem:[%s1] sm:$0xff]
    %v129 = vpack.c.bf16 %v128, %v128
    %v130 = vld [vmem:[#allocation5] sm:$0xf]
    %v131 = vld [vmem:[#allocation5 + $0x4] sm:$0x1]
    %v134 = vunpack.c.l.b16 %v130
    %v135 = vunpack.c.l.b16 %v131
    %v136 = vpack.c.b16 %v135, %v134
    %vm137 = vcmask 72704
    %v139 = vsel %vm137, %v129, 0
    %vm141 = vcmask 1043456
    %vm142 = vcmask 1044480
    %v143 = vsel %vm141, 4294967295, 65535
    %v144 = vsel %vm142, %v143, 0
    %v146 = vand.u32 %v136, %v144
    %148 = vmatprep.subr.bf16.mxu0 0
    %149 = vmatpush1.bf16.msra.mxu0 %v146
    %150 = vmatprep.subr.bf16.mxu0 0
    %151 = vmatpush1.bf16.msra.mxu0 0
    %152 = vmatprep.subr.bf16.mxu0 0
    %153 = vmatpush1.bf16.msra.mxu0 0
    %154 = vmatprep.subr.bf16.mxu0 0
    %155 = vmatpush1.bf16.msra.mxu0 0
    %156 = vmatprep.subr.bf16.mxu0 0
    %157 = vmatpush1.bf16.msra.mxu0 0
    %158 = vmatprep.subr.bf16.mxu0 0
    %159 = vmatpush1.bf16.msra.mxu0 0
    %160 = vmatprep.subr.bf16.mxu0 0
    %161 = vmatpush1.bf16.msra.mxu0 0
    %162 = vmatprep.subr.bf16.mxu0 0
    %163 = vmatpush1.bf16.msra.mxu0 0
    %164 = vmatprep.subr.bf16.mxu0 0
    %165 = vmatpush1.bf16.msra.mxu0 0
    %166 = vmatprep.subr.bf16.mxu0 0
    %167 = vmatpush1.bf16.msra.mxu0 0
    %168 = vmatprep.subr.bf16.mxu0 0
    %169 = vmatpush1.bf16.msra.mxu0 0
    %170 = vmatprep.subr.bf16.mxu0 0
    %171 = vmatpush1.bf16.msra.mxu0 0
    %172 = vmatprep.subr.bf16.mxu0 0
    %173 = vmatpush1.bf16.msra.mxu0 0
    %174 = vmatprep.subr.bf16.mxu0 0
    %175 = vmatpush1.bf16.msra.mxu0 0
    %176 = vmatprep.subr.bf16.mxu0 0
    %177 = vmatpush1.bf16.msra.mxu0 0
    %178 = vmatprep.subr.bf16.mxu0 0
    %179 = vmatpush1.bf16.msra.mxu0 0
    %180 = vmatprep.mubr.bf16.mxu0 0
    %181 = vmatmul.mubr.bf16.gmra.mrb[0].mxu0 %v139
    %v182 = vpop.f32.mrb[0].mxu0
    %v183 = vadd.f32 0.0, %v182
    %v184 = vpop.f32.mrb[0].mxu0
    %v185 = vpop.f32.mrb[0].mxu0
    %v186 = vpop.f32.mrb[0].mxu0
    %187 = vdwg.mxu0
    %v191 = vunpack.c.l.b16 %v125
    %v192 = vunpack.c.l.b16 %v126
    %v193 = vunpack.c.l.b16 %v127
    %v194 = vpack.c.b16 %v192, %v191
    %v195 = vpack.c.b16 %v193, %v193
    %vm197 = vcmask 195584
    %v199 = vsel %vm197, %v124, 0
    %v202 = vsel %vm141, %v195, 0
    %204 = vmatprep.subr.bf16.mxu0 0
    %205 = vmatpush1.bf16.msra.mxu0 %v194
    %206 = vmatprep.subr.bf16.mxu0 0
    %207 = vmatpush1.bf16.msra.mxu0 %v202
    %208 = vmatprep.subr.bf16.mxu0 0
    %209 = vmatpush1.bf16.msra.mxu0 0
    %210 = vmatprep.subr.bf16.mxu0 0
    %211 = vmatpush1.bf16.msra.mxu0 0
    %212 = vmatprep.subr.bf16.mxu0 0
    %213 = vmatpush1.bf16.msra.mxu0 0
    %214 = vmatprep.subr.bf16.mxu0 0
    %215 = vmatpush1.bf16.msra.mxu0 0
    %216 = vmatprep.subr.bf16.mxu0 0
    %217 = vmatpush1.bf16.msra.mxu0 0
    %218 = vmatprep.subr.bf16.mxu0 0
    %219 = vmatpush1.bf16.msra.mxu0 0
    %220 = vmatprep.subr.bf16.mxu0 0
    %221 = vmatpush1.bf16.msra.mxu0 0
    %222 = vmatprep.subr.bf16.mxu0 0
    %223 = vmatpush1.bf16.msra.mxu0 0
    %224 = vmatprep.subr.bf16.mxu0 0
    %225 = vmatpush1.bf16.msra.mxu0 0
    %226 = vmatprep.subr.bf16.mxu0 0
    %227 = vmatpush1.bf16.msra.mxu0 0
    %228 = vmatprep.subr.bf16.mxu0 0
    %229 = vmatpush1.bf16.msra.mxu0 0
    %230 = vmatprep.subr.bf16.mxu0 0
    %231 = vmatpush1.bf16.msra.mxu0 0
    %232 = vmatprep.subr.bf16.mxu0 0
    %233 = vmatpush1.bf16.msra.mxu0 0
    %234 = vmatprep.subr.bf16.mxu0 0
    %235 = vmatpush1.bf16.msra.mxu0 0
    %236 = vmatprep.mubr.bf16.mxu0 0
    %237 = vmatmul.mubr.bf16.gmra.mrb[0].mxu0 %v199
    %v238 = vpop.f32.mrb[0].mxu0
    %v239 = vadd.f32 %v183, %v238
    %v240 = vpop.f32.mrb[0].mxu0
    %v241 = vpop.f32.mrb[0].mxu0
    %v242 = vpop.f32.mrb[0].mxu0
    %243 = vdwg.mxu0
    %v244 = vld [vmem:[#allocation7] sm:$0xff]
    %v245 = vadd.f32 %v239, %v244
    %v246 = vmax.f32 %v245, 0.0
    %v247 = vpack.c.bf16 %v246, %v246
    %v248 = vld [vmem:[#allocation8] sm:$0xf]
    %v249 = vld [vmem:[#allocation8 + $0x4] sm:$0xf]
    %v250 = vld [vmem:[#allocation8 + $0x8] sm:$0xf]
    %v251 = vld [vmem:[#allocation8 + $0xc] sm:$0xf]
    %v252 = vld [vmem:[#allocation8 + $0x10] sm:$0xf]
    %v253 = vld [vmem:[#allocation8 + $0x14] sm:$0xf]
    %v254 = vld [vmem:[#allocation8 + $0x18] sm:$0xf]
    %v255 = vld [vmem:[#allocation8 + $0x1c] sm:$0xf]
    %v256 = vld [vmem:[#allocation8 + $0x20] sm:$0xf]
    %v257 = vld [vmem:[#allocation8 + $0x24] sm:$0xf]
    %v258 = vld [vmem:[#allocation8 + $0x28] sm:$0xf]
    %v259 = vld [vmem:[#allocation8 + $0x2c] sm:$0xf]
    %v260 = vld [vmem:[#allocation8 + $0x30] sm:$0xf]
    %v261 = vld [vmem:[#allocation8 + $0x34] sm:$0xf]
    %v262 = vld [vmem:[#allocation8 + $0x38] sm:$0xf]
    %v263 = vld [vmem:[#allocation8 + $0x3c] sm:$0xf]
    %v264 = vld [vmem:[#allocation10] sm:$0xff]
    %v281 = vunpack.c.l.b16 %v248
    %v282 = vunpack.c.l.b16 %v249
    %v283 = vunpack.c.l.b16 %v250
    %v284 = vunpack.c.l.b16 %v251
    %v285 = vunpack.c.l.b16 %v252
    %v286 = vunpack.c.l.b16 %v253
    %v287 = vunpack.c.l.b16 %v254
    %v288 = vunpack.c.l.b16 %v255
    %v289 = vunpack.c.l.b16 %v256
    %v290 = vunpack.c.l.b16 %v257
    %v291 = vunpack.c.l.b16 %v258
    %v292 = vunpack.c.l.b16 %v259
    %v293 = vunpack.c.l.b16 %v260
    %v294 = vunpack.c.l.b16 %v261
    %v295 = vunpack.c.l.b16 %v262
    %v296 = vunpack.c.l.b16 %v263
    %v297 = vpack.c.b16 %v282, %v281
    %v298 = vpack.c.b16 %v284, %v283
    %v299 = vpack.c.b16 %v286, %v285
    %v300 = vpack.c.b16 %v288, %v287
    %v301 = vpack.c.b16 %v290, %v289
    %v302 = vpack.c.b16 %v292, %v291
    %v303 = vpack.c.b16 %v294, %v293
    %v304 = vpack.c.b16 %v296, %v295
    %313 = vmatprep.subr.bf16.mxu0 0
    %314 = vmatpush1.bf16.msra.mxu0 %v297
    %315 = vmatprep.subr.bf16.mxu0 0
    %316 = vmatpush1.bf16.msra.mxu0 %v298
    %317 = vmatprep.subr.bf16.mxu0 0
    %318 = vmatpush1.bf16.msra.mxu0 %v299
    %319 = vmatprep.subr.bf16.mxu0 0
    %320 = vmatpush1.bf16.msra.mxu0 %v300
    %321 = vmatprep.subr.bf16.mxu0 0
    %322 = vmatpush1.bf16.msra.mxu0 %v301
    %323 = vmatprep.subr.bf16.mxu0 0
    %324 = vmatpush1.bf16.msra.mxu0 %v302
    %325 = vmatprep.subr.bf16.mxu0 0
    %326 = vmatpush1.bf16.msra.mxu0 %v303
    %327 = vmatprep.subr.bf16.mxu0 0
    %328 = vmatpush1.bf16.msra.mxu0 %v304
    %329 = vmatprep.subr.bf16.mxu0 0
    %330 = vmatpush1.bf16.msra.mxu0 0
    %331 = vmatprep.subr.bf16.mxu0 0
    %332 = vmatpush1.bf16.msra.mxu0 0
    %333 = vmatprep.subr.bf16.mxu0 0
    %334 = vmatpush1.bf16.msra.mxu0 0
    %335 = vmatprep.subr.bf16.mxu0 0
    %336 = vmatpush1.bf16.msra.mxu0 0
    %337 = vmatprep.subr.bf16.mxu0 0
    %338 = vmatpush1.bf16.msra.mxu0 0
    %339 = vmatprep.subr.bf16.mxu0 0
    %340 = vmatpush1.bf16.msra.mxu0 0
    %341 = vmatprep.subr.bf16.mxu0 0
    %342 = vmatpush1.bf16.msra.mxu0 0
    %343 = vmatprep.subr.bf16.mxu0 0
    %344 = vmatpush1.bf16.msra.mxu0 0
    %345 = vmatprep.mubr.bf16.mxu0 0
    %346 = vmatmul.mubr.bf16.gmra.mrb[0].mxu0 %v247
    %v347 = vpop.f32.mrb[0].mxu0
    %v348 = vadd.f32 %v264, %v347
    %v349 = vpop.f32.mrb[0].mxu0
    %v350 = vpop.f32.mrb[0].mxu0
    %v351 = vpop.f32.mrb[0].mxu0
    %352 = vdwg.mxu0
    %v353 = vmax.f32 %v348, 0.0
    %v354 = vpack.c.bf16 %v353, %v353
    %v355 = vld [vmem:[#allocation11] sm:$0xf]
    %v356 = vld [vmem:[#allocation11 + $0x4] sm:$0xf]
    %v357 = vld [vmem:[#allocation11 + $0x8] sm:$0xf]
    %v358 = vld [vmem:[#allocation11 + $0xc] sm:$0xf]
    %v359 = vld [vmem:[#allocation11 + $0x10] sm:$0xf]
    %v360 = vld [vmem:[#allocation11 + $0x14] sm:$0xf]
    %v361 = vld [vmem:[#allocation11 + $0x18] sm:$0xf]
    %v362 = vld [vmem:[#allocation11 + $0x1c] sm:$0xf]
    %v363 = vld [vmem:[#allocation11 + $0x20] sm:$0xf]
    %v364 = vld [vmem:[#allocation11 + $0x24] sm:$0xf]
    %v365 = vld [vmem:[#allocation11 + $0x28] sm:$0xf]
    %v366 = vld [vmem:[#allocation11 + $0x2c] sm:$0xf]
    %v367 = vld [vmem:[#allocation11 + $0x30] sm:$0xf]
    %v368 = vld [vmem:[#allocation11 + $0x34] sm:$0xf]
    %v369 = vld [vmem:[#allocation11 + $0x38] sm:$0xf]
    %v370 = vld [vmem:[#allocation11 + $0x3c] sm:$0xf]
    %v371 = vld [vmem:[#allocation13] sm:$0xff]
    %v388 = vunpack.c.l.b16 %v355
    %v389 = vunpack.c.l.b16 %v356
    %v390 = vunpack.c.l.b16 %v357
    %v391 = vunpack.c.l.b16 %v358
    %v392 = vunpack.c.l.b16 %v359
    %v393 = vunpack.c.l.b16 %v360
    %v394 = vunpack.c.l.b16 %v361
    %v395 = vunpack.c.l.b16 %v362
    %v396 = vunpack.c.l.b16 %v363
    %v397 = vunpack.c.l.b16 %v364
    %v398 = vunpack.c.l.b16 %v365
    %v399 = vunpack.c.l.b16 %v366
    %v400 = vunpack.c.l.b16 %v367
    %v401 = vunpack.c.l.b16 %v368
    %v402 = vunpack.c.l.b16 %v369
    %v403 = vunpack.c.l.b16 %v370
    %v404 = vpack.c.b16 %v389, %v388
    %v405 = vpack.c.b16 %v391, %v390
    %v406 = vpack.c.b16 %v393, %v392
    %v407 = vpack.c.b16 %v395, %v394
    %v408 = vpack.c.b16 %v397, %v396
    %v409 = vpack.c.b16 %v399, %v398
    %v410 = vpack.c.b16 %v401, %v400
    %v411 = vpack.c.b16 %v403, %v402
    %420 = vmatprep.subr.bf16.mxu0 0
    %421 = vmatpush1.bf16.msra.mxu0 %v404
    %422 = vmatprep.subr.bf16.mxu0 0
    %423 = vmatpush1.bf16.msra.mxu0 %v405
    %424 = vmatprep.subr.bf16.mxu0 0
    %425 = vmatpush1.bf16.msra.mxu0 %v406
    %426 = vmatprep.subr.bf16.mxu0 0
    %427 = vmatpush1.bf16.msra.mxu0 %v407
    %428 = vmatprep.subr.bf16.mxu0 0
    %429 = vmatpush1.bf16.msra.mxu0 %v408
    %430 = vmatprep.subr.bf16.mxu0 0
    %431 = vmatpush1.bf16.msra.mxu0 %v409
    %432 = vmatprep.subr.bf16.mxu0 0
    %433 = vmatpush1.bf16.msra.mxu0 %v410
    %434 = vmatprep.subr.bf16.mxu0 0
    %435 = vmatpush1.bf16.msra.mxu0 %v411
    %436 = vmatprep.subr.bf16.mxu0 0
    %437 = vmatpush1.bf16.msra.mxu0 0
    %438 = vmatprep.subr.bf16.mxu0 0
    %439 = vmatpush1.bf16.msra.mxu0 0
    %440 = vmatprep.subr.bf16.mxu0 0
    %441 = vmatpush1.bf16.msra.mxu0 0
    %442 = vmatprep.subr.bf16.mxu0 0
    %443 = vmatpush1.bf16.msra.mxu0 0
    %444 = vmatprep.subr.bf16.mxu0 0
    %445 = vmatpush1.bf16.msra.mxu0 0
    %446 = vmatprep.subr.bf16.mxu0 0
    %447 = vmatpush1.bf16.msra.mxu0 0
    %448 = vmatprep.subr.bf16.mxu0 0
    %449 = vmatpush1.bf16.msra.mxu0 0
    %450 = vmatprep.subr.bf16.mxu0 0
    %451 = vmatpush1.bf16.msra.mxu0 0
    %452 = vmatprep.mubr.bf16.mxu0 0
    %453 = vmatmul.mubr.bf16.gmra.mrb[0].mxu0 %v354
    %v454 = vpop.f32.mrb[0].mxu0
    %v455 = vadd.f32 %v371, %v454
    %v456 = vpop.f32.mrb[0].mxu0
    %v457 = vpop.f32.mrb[0].mxu0
    %v458 = vpop.f32.mrb[0].mxu0
    %459 = vdwg.mxu0
    %460 = vst [vmem:[#allocation14] sm:$0xff] %v455
    // Predicated region
    $region66: #{dynamics_model_forward.1} parent=1 // pred_check
      _
    $region67: #{dynamics_model_forward.1} parent=1 // pred_check_branch
      %462 = sbr.rel (0) target = $region69
    $region68: #{dynamics_model_forward.1} parent=1 // pred_region
      %s464 = ssub.s32 128, 128
      %465 = vsyncadd [#allocation4], %s464
      %s467 = sshll.u32 [#allocation14], 4
      %s468 = int_to_ptr.vmem [resolvable:$true] %s467
      %470 = dma.vmem_to_hbm [thread:$0]  %s468, 128, %s9, [#allocation4]
    $region69: #{dynamics_model_forward.1} parent=1 // pred_fallthru
      _
    // Predicated region
    $region70: #{dynamics_model_forward.1} parent=1 // pred_check
      _
    $region71: #{dynamics_model_forward.1} parent=1 // pred_check_branch
      %472 = sbr.rel (0) target = $region73
    $region72: #{dynamics_model_forward.1} parent=1 // pred_region
      %473 = dma.done [#allocation4], 128
    $region73: #{dynamics_model_forward.1} parent=1 // pred_fallthru
      _
    %474 = vsyncpa [#allocation3], 1
    %475 = vsyncpa [#allocation6], 1
    %476 = vsyncpa [#allocation9], 1
    %477 = vsyncpa [#allocation12], 1
    %478 = vsyncpa [#allocation4], 1

</llo_original>
